<compile_context>
chip_gen: v7x
topology: tpu7x:2x2x1
jax: 0.10.0
libtpu: 0.0.40
codegen_flags: <defaults>
</compile_context>

<pallas_src>
import functools

import jax
import jax.numpy as jnp
from jax.experimental import pallas as pl
from jax.experimental.pallas import tpu as pltpu

TB_CAP = 2048  # max rows per grid step


def _round_up(x, m):
    return (x + m - 1) // m * m


def mlp_kernel(x_ref,
               w1_ref, b1_ref,
               w2_ref, b2_ref,
               w3_ref, b3_ref,
               w4_ref, b4_ref,
               o_ref):
    # bf16 operands on the MXU, f32 accumulation; elementwise stays in f32.
    x = x_ref[...].astype(jnp.bfloat16)

    h = jnp.dot(x, w1_ref[...], preferred_element_type=jnp.float32) + b1_ref[...]
    h = jnp.maximum(h, 0.0)

    h = jnp.dot(h.astype(jnp.bfloat16), w2_ref[...],
                preferred_element_type=jnp.float32) + b2_ref[...]
    h = jnp.maximum(h, 0.0)

    h = jnp.dot(h.astype(jnp.bfloat16), w3_ref[...],
                preferred_element_type=jnp.float32) + b3_ref[...]
    h = jnp.maximum(h, 0.0)

    logits = jnp.dot(h.astype(jnp.bfloat16), w4_ref[...],
                     preferred_element_type=jnp.float32) + b4_ref[...]

    # (TB, 1) narrow output; sigmoid on exactly one lane per row.
    o_ref[...] = jax.nn.sigmoid(logits)


def _pick_tile(batch, tb):
    """Batch tile: multiple of 8, capped, >= 2 grid steps for larger batches."""
    if tb is not None:
        return max(8, _round_up(int(tb), 8))
    b8 = _round_up(batch, 8)
    if b8 <= 16:
        return b8
    # Keep at least 2 grid steps (v7x megacore) while amortizing step overhead.
    return min(TB_CAP, _round_up((b8 + 1) // 2, 8))


@functools.partial(jax.jit, static_argnames=("tb",))
def mlp_forward(x, params, *, tb=None):
    """x: (B, 48) float32.  params: (w1,b1,...,w4,b4); w* bf16 (in,out), b* f32 (1,out)."""
    (w1, b1, w2, b2, w3, b3, w4, b4) = params
    B, F = x.shape

    TB = _pick_tile(B, tb)
    B_pad = _round_up(B, TB)
    if B_pad != B:
        x = jnp.pad(x, ((0, B_pad - B), (0, 0)))
    grid = (B_pad // TB,)

    const_spec = lambda shape: pl.BlockSpec(shape, lambda i: (0, 0))

    in_specs = [
        pl.BlockSpec((TB, F), lambda i: (i, 0)),        # x: batch-tiled
        const_spec(w1.shape), const_spec(b1.shape),     # params: resident
        const_spec(w2.shape), const_spec(b2.shape),
        const_spec(w3.shape), const_spec(b3.shape),
        const_spec(w4.shape), const_spec(b4.shape),
    ]
    out_specs = pl.BlockSpec((TB, 1), lambda i: (i, 0))  # narrow (TB,1) output

    param_bytes = sum(int(a.size) * a.dtype.itemsize
                      for a in (w1, b1, w2, b2, w3, b3, w4, b4))
    cost = pl.CostEstimate(
        flops=2 * B_pad * (48 * 96 + 96 * 192 + 192 * 384 + 384 * 1),
        transcendentals=B_pad,  # one sigmoid per row
        bytes_accessed=B_pad * F * 4 + B_pad * 1 * 4 + param_bytes,
    )

    y = pl.pallas_call(
        mlp_kernel,
        out_shape=jax.ShapeDtypeStruct((B_pad, 1), jnp.float32),
        grid=grid,
        in_specs=in_specs,
        out_specs=out_specs,
        compiler_params=pltpu.CompilerParams(
            dimension_semantics=("parallel",),
            vmem_limit_bytes=32 * 1024 * 1024,
        ),
        cost_estimate=cost,
    )(x, w1, b1, w2, b2, w3, b3, w4, b4)

    # Only a row slice (and only if the batch was padded); no column slice.
    return y if B_pad == B else y[:B]


def init_linear(key, fan_in, fan_out):
    """Deterministic init mimicking torch.nn.Linear default (uniform +-1/sqrt(fan_in))."""
    kw, kb = jax.random.split(key)
    bound = 1.0 / jnp.sqrt(jnp.float32(fan_in))
    w = jax.random.uniform(kw, (fan_in, fan_out), jnp.float32, -bound, bound)
    b = jax.random.uniform(kb, (1, fan_out), jnp.float32, -bound, bound)
    return w, b


def init_params(key):
    k1, k2, k3, k4 = jax.random.split(key, 4)
    w1, b1 = init_linear(k1, 48, 96)
    w2, b2 = init_linear(k2, 96, 192)
    w3, b3 = init_linear(k3, 192, 384)
    w4, b4 = init_linear(k4, 384, 1)
    # Weights stored in bf16 (MXU operands / halved DMA); biases stay f32.
    return (w1.astype(jnp.bfloat16), b1,
            w2.astype(jnp.bfloat16), b2,
            w3.astype(jnp.bfloat16), b3,
            w4.astype(jnp.bfloat16), b4)


def reference_forward_bf16(x, params):
    """Same math as the kernel: bf16 matmul operands, f32 accumulation."""
    (w1, b1, w2, b2, w3, b3, w4, b4) = params

    def lin(h, w, b):
        return jnp.dot(h.astype(jnp.bfloat16), w.astype(jnp.bfloat16),
                       preferred_element_type=jnp.float32) + b

    h = jnp.maximum(lin(x, w1, b1), 0.0)
    h = jnp.maximum(lin(h, w2, b2), 0.0)
    h = jnp.maximum(lin(h, w3, b3), 0.0)
    return jax.nn.sigmoid(lin(h, w4, b4))


def reference_forward_f32(x, params):
    (w1, b1, w2, b2, w3, b3, w4, b4) = params

    def lin(h, w, b):
        return jnp.dot(h, w.astype(jnp.float32),
                       preferred_element_type=jnp.float32) + b

    h = jnp.maximum(lin(x, w1, b1), 0.0)
    h = jnp.maximum(lin(h, w2, b2), 0.0)
    h = jnp.maximum(lin(h, w3, b3), 0.0)
    return jax.nn.sigmoid(lin(h, w4, b4))


if __name__ == "__main__":
    key = jax.random.PRNGKey(0)
    k_params, k_x = jax.random.split(key)

    params = init_params(k_params)
    x = jax.random.normal(k_x, (8, 48), dtype=jnp.float32)  # batch=8, features=48

    y = mlp_forward(x, params)
    y = jax.block_until_ready(y)

    y_ref_bf16 = reference_forward_bf16(x, params)
    y_ref_f32 = reference_forward_f32(x, params)

    assert y.shape == (8, 1)
    assert jnp.all(jnp.isfinite(y))
    # Tight check vs a reference doing the same bf16-operand / f32-accum math.
    assert jnp.allclose(y, y_ref_bf16, atol=2e-3, rtol=0.0)
    # Sanity check vs a full-f32 reference (bf16 matmul inputs => looser bound).
    assert jnp.allclose(y, y_ref_f32, atol=2e-2, rtol=0.0)

    # Also exercise a padded / multi-step grid path (batch not multiple of TB).
    x_big = jax.random.normal(k_x, (100, 48), dtype=jnp.float32)
    y_big = jax.block_until_ready(mlp_forward(x_big, params))
    assert y_big.shape == (100, 1)
    assert jnp.allclose(y_big, reference_forward_bf16(x_big, params),
                        atol=2e-3, rtol=0.0)

    print("KERNEL_OK")
</pallas_src>

<mosaic_0001>
module attributes {stable_mosaic.version = 11 : i64} {
  func.func @mlp_kernel(%arg0: i32, %arg1: memref<8x48xf32, #tpu.memory_space<vmem>>, %arg2: memref<48x96xbf16, #tpu.memory_space<vmem>>, %arg3: memref<1x96xf32, #tpu.memory_space<vmem>>, %arg4: memref<96x192xbf16, #tpu.memory_space<vmem>>, %arg5: memref<1x192xf32, #tpu.memory_space<vmem>>, %arg6: memref<192x384xbf16, #tpu.memory_space<vmem>>, %arg7: memref<1x384xf32, #tpu.memory_space<vmem>>, %arg8: memref<384x1xbf16, #tpu.memory_space<vmem>>, %arg9: memref<1x1xf32, #tpu.memory_space<vmem>>, %arg10: memref<8x1xf32, #tpu.memory_space<vmem>>) attributes {dimension_semantics = [#tpu.dimension_semantics<parallel>], iteration_bounds = array<i64: 1>, scalar_prefetch = 0 : i64, scratch_operands = 0 : i64, tpu.core_type = #tpu.core_type<tc>, window_params = [{transform_indices = @transform_0, window_bounds = array<i64: 8, 48>}, {pipeline_mode = #tpu.pipeline_mode<synchronous>, transform_indices = @transform_1, window_bounds = array<i64: 48, 96>}, {pipeline_mode = #tpu.pipeline_mode<synchronous>, transform_indices = @transform_2, window_bounds = array<i64: 1, 96>}, {pipeline_mode = #tpu.pipeline_mode<synchronous>, transform_indices = @transform_3, window_bounds = array<i64: 96, 192>}, {pipeline_mode = #tpu.pipeline_mode<synchronous>, transform_indices = @transform_4, window_bounds = array<i64: 1, 192>}, {pipeline_mode = #tpu.pipeline_mode<synchronous>, transform_indices = @transform_5, window_bounds = array<i64: 192, 384>}, {pipeline_mode = #tpu.pipeline_mode<synchronous>, transform_indices = @transform_6, window_bounds = array<i64: 1, 384>}, {pipeline_mode = #tpu.pipeline_mode<synchronous>, transform_indices = @transform_7, window_bounds = array<i64: 384, 1>}, {pipeline_mode = #tpu.pipeline_mode<synchronous>, transform_indices = @transform_8, window_bounds = array<i64: 1, 1>}, {transform_indices = @transform_9, window_bounds = array<i64: 8, 1>}]} {
    %c0 = arith.constant 0 : index
    %c0_0 = arith.constant 0 : index
    %0 = vector.load %arg1[%c0, %c0_0] : memref<8x48xf32, #tpu.memory_space<vmem>>, vector<8x48xf32>
    %1 = arith.truncf %0 : vector<8x48xf32> to vector<8x48xbf16>
    %c0_1 = arith.constant 0 : index
    %c0_2 = arith.constant 0 : index
    %2 = vector.load %arg2[%c0_1, %c0_2] : memref<48x96xbf16, #tpu.memory_space<vmem>>, vector<48x96xbf16>
    %cst = arith.constant dense<0.000000e+00> : vector<8x96xf32>
    %3 = tpu.matmul %1, %2, %cst {dimension_numbers = #tpu.dot_dimension_numbers<[1], [0], [0], [1], [0, 0, 1, 1], [], []>} : vector<8x48xbf16>, vector<48x96xbf16>, vector<8x96xf32> -> vector<8x96xf32>
    %c0_3 = arith.constant 0 : index
    %c0_4 = arith.constant 0 : index
    %4 = vector.load %arg3[%c0_3, %c0_4] : memref<1x96xf32, #tpu.memory_space<vmem>>, vector<1x96xf32>
    %5 = vector.broadcast %4 : vector<1x96xf32> to vector<8x96xf32>
    %6 = arith.addf %3, %5 : vector<8x96xf32>
    %cst_5 = arith.constant 0.000000e+00 : f32
    %7 = vector.broadcast %cst_5 : f32 to vector<8x96xf32>
    %8 = arith.maximumf %6, %7 : vector<8x96xf32>
    %9 = arith.truncf %8 : vector<8x96xf32> to vector<8x96xbf16>
    %c0_6 = arith.constant 0 : index
    %c0_7 = arith.constant 0 : index
    %10 = vector.load %arg4[%c0_6, %c0_7] : memref<96x192xbf16, #tpu.memory_space<vmem>>, vector<96x192xbf16>
    %cst_8 = arith.constant dense<0.000000e+00> : vector<8x192xf32>
    %11 = tpu.matmul %9, %10, %cst_8 {dimension_numbers = #tpu.dot_dimension_numbers<[1], [0], [0], [1], [0, 0, 1, 1], [], []>} : vector<8x96xbf16>, vector<96x192xbf16>, vector<8x192xf32> -> vector<8x192xf32>
    %c0_9 = arith.constant 0 : index
    %c0_10 = arith.constant 0 : index
    %12 = vector.load %arg5[%c0_9, %c0_10] : memref<1x192xf32, #tpu.memory_space<vmem>>, vector<1x192xf32>
    %13 = vector.broadcast %12 : vector<1x192xf32> to vector<8x192xf32>
    %14 = arith.addf %11, %13 : vector<8x192xf32>
    %cst_11 = arith.constant 0.000000e+00 : f32
    %15 = vector.broadcast %cst_11 : f32 to vector<8x192xf32>
    %16 = arith.maximumf %14, %15 : vector<8x192xf32>
    %17 = arith.truncf %16 : vector<8x192xf32> to vector<8x192xbf16>
    %c0_12 = arith.constant 0 : index
    %c0_13 = arith.constant 0 : index
    %18 = vector.load %arg6[%c0_12, %c0_13] : memref<192x384xbf16, #tpu.memory_space<vmem>>, vector<192x384xbf16>
    %cst_14 = arith.constant dense<0.000000e+00> : vector<8x384xf32>
    %19 = tpu.matmul %17, %18, %cst_14 {dimension_numbers = #tpu.dot_dimension_numbers<[1], [0], [0], [1], [0, 0, 1, 1], [], []>} : vector<8x192xbf16>, vector<192x384xbf16>, vector<8x384xf32> -> vector<8x384xf32>
    %c0_15 = arith.constant 0 : index
    %c0_16 = arith.constant 0 : index
    %20 = vector.load %arg7[%c0_15, %c0_16] : memref<1x384xf32, #tpu.memory_space<vmem>>, vector<1x384xf32>
    %21 = vector.broadcast %20 : vector<1x384xf32> to vector<8x384xf32>
    %22 = arith.addf %19, %21 : vector<8x384xf32>
    %cst_17 = arith.constant 0.000000e+00 : f32
    %23 = vector.broadcast %cst_17 : f32 to vector<8x384xf32>
    %24 = arith.maximumf %22, %23 : vector<8x384xf32>
    %25 = arith.truncf %24 : vector<8x384xf32> to vector<8x384xbf16>
    %c0_18 = arith.constant 0 : index
    %c0_19 = arith.constant 0 : index
    %26 = vector.load %arg8[%c0_18, %c0_19] : memref<384x1xbf16, #tpu.memory_space<vmem>>, vector<384x1xbf16>
    %cst_20 = arith.constant dense<0.000000e+00> : vector<8x1xf32>
    %27 = tpu.matmul %25, %26, %cst_20 {dimension_numbers = #tpu.dot_dimension_numbers<[1], [0], [0], [1], [0, 0, 1, 1], [], []>} : vector<8x384xbf16>, vector<384x1xbf16>, vector<8x1xf32> -> vector<8x1xf32>
    %c0_21 = arith.constant 0 : index
    %c0_22 = arith.constant 0 : index
    %28 = vector.load %arg9[%c0_21, %c0_22] : memref<1x1xf32, #tpu.memory_space<vmem>>, vector<1x1xf32>
    %29 = vector.broadcast %28 : vector<1x1xf32> to vector<8x1xf32>
    %30 = arith.addf %27, %29 : vector<8x1xf32>
    %31 = arith.negf %30 : vector<8x1xf32>
    %32 = math.exp %31 : vector<8x1xf32>
    %cst_23 = arith.constant 1.000000e+00 : f32
    %33 = vector.broadcast %cst_23 : f32 to vector<8x1xf32>
    %34 = arith.addf %33, %32 : vector<8x1xf32>
    %35 = arith.divf %33, %34 : vector<8x1xf32>
    %c0_24 = arith.constant 0 : index
    %c0_25 = arith.constant 0 : index
    %36 = vector.load %arg10[%c0_24, %c0_25] : memref<8x1xf32, #tpu.memory_space<vmem>>, vector<8x1xf32>
    tpu.vector_store %arg10[%c0_24, %c0_25], %35 {strides = array<i32>} : memref<8x1xf32, #tpu.memory_space<vmem>>, vector<8x1xf32>,
    return
  }
  func.func @transform_0(%arg0: i32) -> (i32, i32) {
    %c0_i32 = arith.constant 0 : i32
    %c0_i32_0 = arith.constant 0 : i32
    return %arg0, %c0_i32 : i32, i32
  }
  func.func @transform_1(%arg0: i32) -> (i32, i32) {
    %c0_i32 = arith.constant 0 : i32
    %c0_i32_0 = arith.constant 0 : i32
    %c0_i32_1 = arith.constant 0 : i32
    return %c0_i32, %c0_i32_0 : i32, i32
  }
  func.func @transform_2(%arg0: i32) -> (i32, i32) {
    %c0_i32 = arith.constant 0 : i32
    %c0_i32_0 = arith.constant 0 : i32
    %c0_i32_1 = arith.constant 0 : i32
    return %c0_i32, %c0_i32_0 : i32, i32
  }
  func.func @transform_3(%arg0: i32) -> (i32, i32) {
    %c0_i32 = arith.constant 0 : i32
    %c0_i32_0 = arith.constant 0 : i32
    %c0_i32_1 = arith.constant 0 : i32
    return %c0_i32, %c0_i32_0 : i32, i32
  }
  func.func @transform_4(%arg0: i32) -> (i32, i32) {
    %c0_i32 = arith.constant 0 : i32
    %c0_i32_0 = arith.constant 0 : i32
    %c0_i32_1 = arith.constant 0 : i32
    return %c0_i32, %c0_i32_0 : i32, i32
  }
  func.func @transform_5(%arg0: i32) -> (i32, i32) {
    %c0_i32 = arith.constant 0 : i32
    %c0_i32_0 = arith.constant 0 : i32
    %c0_i32_1 = arith.constant 0 : i32
    return %c0_i32, %c0_i32_0 : i32, i32
  }
  func.func @transform_6(%arg0: i32) -> (i32, i32) {
    %c0_i32 = arith.constant 0 : i32
    %c0_i32_0 = arith.constant 0 : i32
    %c0_i32_1 = arith.constant 0 : i32
    return %c0_i32, %c0_i32_0 : i32, i32
  }
  func.func @transform_7(%arg0: i32) -> (i32, i32) {
    %c0_i32 = arith.constant 0 : i32
    %c0_i32_0 = arith.constant 0 : i32
    %c0_i32_1 = arith.constant 0 : i32
    return %c0_i32, %c0_i32_0 : i32, i32
  }
  func.func @transform_8(%arg0: i32) -> (i32, i32) {
    %c0_i32 = arith.constant 0 : i32
    %c0_i32_0 = arith.constant 0 : i32
    %c0_i32_1 = arith.constant 0 : i32
    return %c0_i32, %c0_i32_0 : i32, i32
  }
  func.func @transform_9(%arg0: i32) -> (i32, i32) {
    %c0_i32 = arith.constant 0 : i32
    %c0_i32_0 = arith.constant 0 : i32
    return %arg0, %c0_i32 : i32, i32
  }
}

</mosaic_0001>

<llo_original>
// kernel: mlp_forward.1
$region0: #{mlp_forward.1}
  #allocation0 [shape = 'u32[]', space=smem, size = 0x4, offset = 0x4, fixed_abs, tag = 'smem constant byte address 0x4 - core index']
  #allocation1 [shape = 'u32[144,128]{1,0:T(1,128)}', space=vmem, size = 0x12000, scoped, tag = 'internal scratch']
  #allocation2 [shape = 'f32[1,1]{1,0:T(1,128)S(1)}', space=vmem, size = 0x200, scoped, tag = 'scoped memory for mlp_forward.1']
  %s0 = inlined_call_operand.vmem [shape: f32[8,48], index: 0, kind: input, shape index: {}]
  %s1 = inlined_call_operand.vmem [shape: bf16[48,96], index: 1, kind: input, shape index: {}]
  %s2 = inlined_call_operand.vmem [shape: f32[1,96], index: 2, kind: input, shape index: {}]
  %s3 = inlined_call_operand.vmem [shape: bf16[96,192], index: 3, kind: input, shape index: {}]
  %s4 = inlined_call_operand.vmem [shape: f32[1,192], index: 4, kind: input, shape index: {}]
  %s5 = inlined_call_operand.hbm [shape: bf16[192,384], index: 5, kind: input, shape index: {}]
  %s6 = inlined_call_operand.vmem [shape: f32[1,384], index: 6, kind: input, shape index: {}]
  %s7 = inlined_call_operand.vmem [shape: bf16[384,1], index: 7, kind: input, shape index: {}]
  %s8 = inlined_call_operand.<no memory space> [shape: f32[1,1], index: 8, kind: input, shape index: {}]
  %s9 = inlined_call_operand.vmem [shape: f32[8,1], index: 9, kind: output, shape index: {}]
  %s10 = sld [smem:[#allocation0]]
  $region50: #{mlp_forward.1} parent=0
    _
  %s12 = ssub.s32 1, %s10
  %s13 = scalar_select 0, %s12, %s10
  %v14 = vstv %s8
  %15 = vst [vmem:[#allocation2] sm:$0x1] %v14
  $region1: #{mlp_forward.1} parent=0
    #allocation3 [shape = 'u8[147456]{0}', space=vmem, size = 0x24000, scoped, tag = 'input window, operand 5, single buffered']
    #allocation4 [shape = 's32[1]{0}', space=sflag, size = 0x4, scoped, tag = 'scoped memory for mlp_forward.1']
    %16 = vsyncpa [#allocation4], 0
    // Predicated region
    $region2: #{mlp_forward.1} parent=1 // pred_check
      _
    $region3: #{mlp_forward.1} parent=1 // pred_check_branch
      %18 = sbr.rel (0) target = $region5
    $region4: #{mlp_forward.1} parent=1 // pred_region
      _
    $region5: #{mlp_forward.1} parent=1 // pred_fallthru
      _
    // Predicated region
    $region6: #{mlp_forward.1} parent=1 // pred_check
      _
    $region7: #{mlp_forward.1} parent=1 // pred_check_branch
      %20 = sbr.rel (0) target = $region9
    $region8: #{mlp_forward.1} parent=1 // pred_region
      _
    $region9: #{mlp_forward.1} parent=1 // pred_fallthru
      _
    // Predicated region
    $region10: #{mlp_forward.1} parent=1 // pred_check
      _
    $region11: #{mlp_forward.1} parent=1 // pred_check_branch
      %22 = sbr.rel (0) target = $region13
    $region12: #{mlp_forward.1} parent=1 // pred_region
      _
    $region13: #{mlp_forward.1} parent=1 // pred_fallthru
      _
    // Predicated region
    $region14: #{mlp_forward.1} parent=1 // pred_check
      _
    $region15: #{mlp_forward.1} parent=1 // pred_check_branch
      %24 = sbr.rel (0) target = $region17
    $region16: #{mlp_forward.1} parent=1 // pred_region
      _
    $region17: #{mlp_forward.1} parent=1 // pred_fallthru
      _
    // Predicated region
    $region18: #{mlp_forward.1} parent=1 // pred_check
      _
    $region19: #{mlp_forward.1} parent=1 // pred_check_branch
      %26 = sbr.rel (0) target = $region21
    $region20: #{mlp_forward.1} parent=1 // pred_region
      _
    $region21: #{mlp_forward.1} parent=1 // pred_fallthru
      _
    // Predicated region
    $region22: #{mlp_forward.1} parent=1 // pred_check
      _
    $region23: #{mlp_forward.1} parent=1 // pred_check_branch
      %28 = sbr.rel (0) target = $region25
    $region24: #{mlp_forward.1} parent=1 // pred_region
      %s30 = ssub.s32 4608, 4608
      %31 = vsyncadd [#allocation4], %s30
      %s32 = sshll.u32 [#allocation3], 4
      %s33 = int_to_ptr.vmem [resolvable:$true] %s32
      %38 = dma.hbm_to_vmem [thread:$0]  %s5, 4608, %s33, [#allocation4], 192, 192, 12
    $region25: #{mlp_forward.1} parent=1 // pred_fallthru
      _
    // Predicated region
    $region26: #{mlp_forward.1} parent=1 // pred_check
      _
    $region27: #{mlp_forward.1} parent=1 // pred_check_branch
      %40 = sbr.rel (0) target = $region29
    $region28: #{mlp_forward.1} parent=1 // pred_region
      _
    $region29: #{mlp_forward.1} parent=1 // pred_fallthru
      _
    // Predicated region
    $region30: #{mlp_forward.1} parent=1 // pred_check
      _
    $region31: #{mlp_forward.1} parent=1 // pred_check_branch
      %42 = sbr.rel (0) target = $region33
    $region32: #{mlp_forward.1} parent=1 // pred_region
      _
    $region33: #{mlp_forward.1} parent=1 // pred_fallthru
      _
    // Predicated region
    $region34: #{mlp_forward.1} parent=1 // pred_check
      _
    $region35: #{mlp_forward.1} parent=1 // pred_check_branch
      %44 = sbr.rel (0) target = $region37
    $region36: #{mlp_forward.1} parent=1 // pred_region
      _
    $region37: #{mlp_forward.1} parent=1 // pred_fallthru
      _
    // Predicated region
    $region38: #{mlp_forward.1} parent=1 // pred_check
      _
    $region39: #{mlp_forward.1} parent=1 // pred_check_branch
      %46 = sbr.rel (0) target = $region41
    $region40: #{mlp_forward.1} parent=1 // pred_region
      %47 = dma.done [#allocation4], 4608
    $region41: #{mlp_forward.1} parent=1 // pred_fallthru
      _
    %v49 = vld [vmem:[%s0] sm:$0xff]
    %v50 = vpack.c.bf16 %v49, %v49
    %v51 = vld [vmem:[%s1] sm:$0xf]
    %v52 = vld [vmem:[%s1 + $0x4] sm:$0xf]
    %v53 = vld [vmem:[%s1 + $0x8] sm:$0xf]
    %v54 = vld [vmem:[%s1 + $0xc] sm:$0xf]
    %v55 = vld [vmem:[%s1 + $0x10] sm:$0xf]
    %v56 = vld [vmem:[%s1 + $0x14] sm:$0xf]
    %v57 = vld [vmem:[%s2] sm:$0x1]
    %v59 = vlaneseq
    %v60 = vshrl.u32 %v59, 7
    %v61 = vsub.s32 0, %v60
    %v62 = vrot.slane %v57, %v61
    %v70 = vunpack.c.l.b16 %v51
    %v71 = vunpack.c.l.b16 %v52
    %v72 = vunpack.c.l.b16 %v53
    %v73 = vunpack.c.l.b16 %v54
    %v74 = vunpack.c.l.b16 %v55
    %v75 = vunpack.c.l.b16 %v56
    %v76 = vpack.c.b16 %v71, %v70
    %v77 = vpack.c.b16 %v73, %v72
    %v78 = vpack.c.b16 %v75, %v74
    %vm82 = vcmask 392192
    %v84 = vsel %vm82, %v50, 0
    %86 = vmatprep.subr.bf16.mxu0 0
    %87 = vmatpush1.bf16.msra.mxu0 %v76
    %88 = vmatprep.subr.bf16.mxu0 0
    %89 = vmatpush1.bf16.msra.mxu0 %v77
    %90 = vmatprep.subr.bf16.mxu0 0
    %91 = vmatpush1.bf16.msra.mxu0 %v78
    %92 = vmatprep.subr.bf16.mxu0 0
    %93 = vmatpush1.bf16.msra.mxu0 0
    %94 = vmatprep.subr.bf16.mxu0 0
    %95 = vmatpush1.bf16.msra.mxu0 0
    %96 = vmatprep.subr.bf16.mxu0 0
    %97 = vmatpush1.bf16.msra.mxu0 0
    %98 = vmatprep.subr.bf16.mxu0 0
    %99 = vmatpush1.bf16.msra.mxu0 0
    %100 = vmatprep.subr.bf16.mxu0 0
    %101 = vmatpush1.bf16.msra.mxu0 0
    %102 = vmatprep.subr.bf16.mxu0 0
    %103 = vmatpush1.bf16.msra.mxu0 0
    %104 = vmatprep.subr.bf16.mxu0 0
    %105 = vmatpush1.bf16.msra.mxu0 0
    %106 = vmatprep.subr.bf16.mxu0 0
    %107 = vmatpush1.bf16.msra.mxu0 0
    %108 = vmatprep.subr.bf16.mxu0 0
    %109 = vmatpush1.bf16.msra.mxu0 0
    %110 = vmatprep.subr.bf16.mxu0 0
    %111 = vmatpush1.bf16.msra.mxu0 0
    %112 = vmatprep.subr.bf16.mxu0 0
    %113 = vmatpush1.bf16.msra.mxu0 0
    %114 = vmatprep.subr.bf16.mxu0 0
    %115 = vmatpush1.bf16.msra.mxu0 0
    %116 = vmatprep.subr.bf16.mxu0 0
    %117 = vmatpush1.bf16.msra.mxu0 0
    %118 = vmatprep.mubr.bf16.mxu0 0
    %119 = vmatmul.mubr.bf16.gmra.mrb[0].mxu0 %v84
    %v120 = vpop.f32.mrb[0].mxu0
    %v121 = vadd.f32 %v62, %v120
    %v122 = vpop.f32.mrb[0].mxu0
    %v123 = vpop.f32.mrb[0].mxu0
    %v124 = vpop.f32.mrb[0].mxu0
    %125 = vdwg.mxu0
    %v126 = vmax.f32 %v121, 0.0
    %v127 = vpack.c.bf16 %v126, %v126
    %v128 = vld [vmem:[%s3] sm:$0xff]
    %v129 = vld [vmem:[%s3 + $0x8] sm:$0xff]
    %v130 = vld [vmem:[%s3 + $0x10] sm:$0xff]
    %v131 = vld [vmem:[%s3 + $0x18] sm:$0xff]
    %v132 = vld [vmem:[%s3 + $0x20] sm:$0xff]
    %v133 = vld [vmem:[%s3 + $0x28] sm:$0xff]
    %v134 = vld [vmem:[%s3 + $0x30] sm:$0xff]
    %v135 = vld [vmem:[%s3 + $0x38] sm:$0xff]
    %v136 = vld [vmem:[%s3 + $0x40] sm:$0xff]
    %v137 = vld [vmem:[%s3 + $0x48] sm:$0xff]
    %v138 = vld [vmem:[%s3 + $0x50] sm:$0xff]
    %v139 = vld [vmem:[%s3 + $0x58] sm:$0xff]
    %v140 = vld [vmem:[%s4] sm:$0x3]
    %v142 = vlaneseq
    %v143 = vshrl.u32 %v142, 7
    %v144 = vsub.s32 0, %v143
    %v145 = vrot.slane %v140, %v144
    %v146 = vlaneseq
    %v147 = vshrl.u32 %v146, 7
    %v148 = vsub.s32 1, %v147
    %v149 = vrot.slane %v140, %v148
    %v164 = vunpack.c.l.b16 %v128
    %v165 = vunpack.c.h.b16 %v128
    %v166 = vunpack.c.l.b16 %v129
    %v167 = vunpack.c.h.b16 %v129
    %v168 = vunpack.c.l.b16 %v130
    %v169 = vunpack.c.h.b16 %v130
    %v170 = vunpack.c.l.b16 %v131
    %v171 = vunpack.c.h.b16 %v131
    %v172 = vunpack.c.l.b16 %v132
    %v173 = vunpack.c.h.b16 %v132
    %v174 = vunpack.c.l.b16 %v133
    %v175 = vunpack.c.h.b16 %v133
    %v176 = vunpack.c.l.b16 %v134
    %v177 = vunpack.c.h.b16 %v134
    %v178 = vunpack.c.l.b16 %v135
    %v179 = vunpack.c.h.b16 %v135
    %v180 = vunpack.c.l.b16 %v136
    %v181 = vunpack.c.h.b16 %v136
    %v182 = vunpack.c.l.b16 %v137
    %v183 = vunpack.c.h.b16 %v137
    %v184 = vunpack.c.l.b16 %v138
    %v185 = vunpack.c.h.b16 %v138
    %v186 = vunpack.c.l.b16 %v139
    %v187 = vunpack.c.h.b16 %v139
    %v188 = vpack.c.b16 %v166, %v164
    %v189 = vpack.c.b16 %v167, %v165
    %v190 = vpack.c.b16 %v170, %v168
    %v191 = vpack.c.b16 %v171, %v169
    %v192 = vpack.c.b16 %v174, %v172
    %v193 = vpack.c.b16 %v175, %v173
    %v194 = vpack.c.b16 %v178, %v176
    %v195 = vpack.c.b16 %v179, %v177
    %v196 = vpack.c.b16 %v182, %v180
    %v197 = vpack.c.b16 %v183, %v181
    %v198 = vpack.c.b16 %v186, %v184
    %v199 = vpack.c.b16 %v187, %v185
    %vm212 = vcmask 785408
    %v214 = vsel %vm212, %v127, 0
    %216 = vmatprep.subr.bf16.mxu0 %v189
    %217 = vmatpush1.bf16.msra.mxu0 %v188
    %218 = vmatprep.subr.bf16.mxu0 %v191
    %219 = vmatpush1.bf16.msra.mxu0 %v190
    %220 = vmatprep.subr.bf16.mxu0 %v193
    %221 = vmatpush1.bf16.msra.mxu0 %v192
    %222 = vmatprep.subr.bf16.mxu0 %v195
    %223 = vmatpush1.bf16.msra.mxu0 %v194
    %224 = vmatprep.subr.bf16.mxu0 %v197
    %225 = vmatpush1.bf16.msra.mxu0 %v196
    %226 = vmatprep.subr.bf16.mxu0 %v199
    %227 = vmatpush1.bf16.msra.mxu0 %v198
    %228 = vmatprep.subr.bf16.mxu0 0
    %229 = vmatpush1.bf16.msra.mxu0 0
    %230 = vmatprep.subr.bf16.mxu0 0
    %231 = vmatpush1.bf16.msra.mxu0 0
    %232 = vmatprep.subr.bf16.mxu0 0
    %233 = vmatpush1.bf16.msra.mxu0 0
    %234 = vmatprep.subr.bf16.mxu0 0
    %235 = vmatpush1.bf16.msra.mxu0 0
    %236 = vmatprep.subr.bf16.mxu0 0
    %237 = vmatpush1.bf16.msra.mxu0 0
    %238 = vmatprep.subr.bf16.mxu0 0
    %239 = vmatpush1.bf16.msra.mxu0 0
    %240 = vmatprep.subr.bf16.mxu0 0
    %241 = vmatpush1.bf16.msra.mxu0 0
    %242 = vmatprep.subr.bf16.mxu0 0
    %243 = vmatpush1.bf16.msra.mxu0 0
    %244 = vmatprep.subr.bf16.mxu0 0
    %245 = vmatpush1.bf16.msra.mxu0 0
    %246 = vmatprep.subr.bf16.mxu0 0
    %247 = vmatpush1.bf16.msra.mxu0 0
    %248 = vmatprep.mubr.bf16.mxu0 0
    %249 = vmatmul.mubr.bf16.gmra.mrb[0].mxu0 %v214
    %v250 = vpop.f32.mrb[0].mxu0
    %v251 = vadd.f32 %v145, %v250
    %v252 = vpop.f32.mrb[0].mxu0
    %v253 = vadd.f32 %v149, %v252
    %v254 = vpop.f32.mrb[0].mxu0
    %v255 = vpop.f32.mrb[0].mxu0
    %256 = vdwg.mxu0
    %v257 = vmax.f32 %v251, 0.0
    %v258 = vmax.f32 %v253, 0.0
    %v259 = vpack.c.bf16 %v257, %v257
    %v260 = vpack.c.bf16 %v258, %v258
    %v261 = vld [vmem:[#allocation3] sm:$0xff]
    %v262 = vld [vmem:[#allocation3 + $0x8] sm:$0xf]
    %v263 = vld [vmem:[#allocation3 + $0xc] sm:$0xff]
    %v264 = vld [vmem:[#allocation3 + $0x14] sm:$0xf]
    %v265 = vld [vmem:[#allocation3 + $0x18] sm:$0xff]
    %v266 = vld [vmem:[#allocation3 + $0x20] sm:$0xf]
    %v267 = vld [vmem:[#allocation3 + $0x24] sm:$0xff]
    %v268 = vld [vmem:[#allocation3 + $0x2c] sm:$0xf]
    %v269 = vld [vmem:[#allocation3 + $0x30] sm:$0xff]
    %v270 = vld [vmem:[#allocation3 + $0x38] sm:$0xf]
    %v271 = vld [vmem:[#allocation3 + $0x3c] sm:$0xff]
    %v272 = vld [vmem:[#allocation3 + $0x44] sm:$0xf]
    %v273 = vld [vmem:[#allocation3 + $0x48] sm:$0xff]
    %v274 = vld [vmem:[#allocation3 + $0x50] sm:$0xf]
    %v275 = vld [vmem:[#allocation3 + $0x54] sm:$0xff]
    %v276 = vld [vmem:[#allocation3 + $0x5c] sm:$0xf]
    %v277 = vld [vmem:[#allocation3 + $0x60] sm:$0xff]
    %v278 = vld [vmem:[#allocation3 + $0x68] sm:$0xf]
    %v279 = vld [vmem:[#allocation3 + $0x6c] sm:$0xff]
    %v280 = vld [vmem:[#allocation3 + $0x74] sm:$0xf]
    %v281 = vld [vmem:[#allocation3 + $0x78] sm:$0xff]
    %v282 = vld [vmem:[#allocation3 + $0x80] sm:$0xf]
    %v283 = vld [vmem:[#allocation3 + $0x84] sm:$0xff]
    %v284 = vld [vmem:[#allocation3 + $0x8c] sm:$0xf]
    %v285 = vld [vmem:[#allocation3 + $0x90] sm:$0xff]
    %v286 = vld [vmem:[#allocation3 + $0x98] sm:$0xf]
    %v287 = vld [vmem:[#allocation3 + $0x9c] sm:$0xff]
    %v288 = vld [vmem:[#allocation3 + $0xa4] sm:$0xf]
    %v289 = vld [vmem:[#allocation3 + $0xa8] sm:$0xff]
    %v290 = vld [vmem:[#allocation3 + $0xb0] sm:$0xf]
    %v291 = vld [vmem:[#allocation3 + $0xb4] sm:$0xff]
    %v292 = vld [vmem:[#allocation3 + $0xbc] sm:$0xf]
    %v293 = vld [vmem:[#allocation3 + $0xc0] sm:$0xff]
    %v294 = vld [vmem:[#allocation3 + $0xc8] sm:$0xf]
    %v295 = vld [vmem:[#allocation3 + $0xcc] sm:$0xff]
    %v296 = vld [vmem:[#allocation3 + $0xd4] sm:$0xf]
    %v297 = vld [vmem:[#allocation3 + $0xd8] sm:$0xff]
    %v298 = vld [vmem:[#allocation3 + $0xe0] sm:$0xf]
    %v299 = vld [vmem:[#allocation3 + $0xe4] sm:$0xff]
    %v300 = vld [vmem:[#allocation3 + $0xec] sm:$0xf]
    %v301 = vld [vmem:[#allocation3 + $0xf0] sm:$0xff]
    %v302 = vld [vmem:[#allocation3 + $0xf8] sm:$0xf]
    %v303 = vld [vmem:[#allocation3 + $0xfc] sm:$0xff]
    %v304 = vld [vmem:[#allocation3 + $0x104] sm:$0xf]
    %v305 = vld [vmem:[#allocation3 + $0x108] sm:$0xff]
    %v306 = vld [vmem:[#allocation3 + $0x110] sm:$0xf]
    %v307 = vld [vmem:[#allocation3 + $0x114] sm:$0xff]
    %v308 = vld [vmem:[#allocation3 + $0x11c] sm:$0xf]
    %v309 = vld [vmem:[%s6] sm:$0x7]
    %v311 = vlaneseq
    %v312 = vshrl.u32 %v311, 7
    %v313 = vsub.s32 0, %v312
    %v314 = vrot.slane %v309, %v313
    %v315 = vlaneseq
    %v316 = vshrl.u32 %v315, 7
    %v317 = vsub.s32 1, %v316
    %v318 = vrot.slane %v309, %v317
    %v319 = vlaneseq
    %v320 = vshrl.u32 %v319, 7
    %v321 = vsub.s32 2, %v320
    %v322 = vrot.slane %v309, %v321
    %v374 = vunpack.c.l.b16 %v261
    %v375 = vunpack.c.h.b16 %v261
    %v376 = vunpack.c.l.b16 %v262
    %v377 = vunpack.c.l.b16 %v263
    %v378 = vunpack.c.h.b16 %v263
    %v379 = vunpack.c.l.b16 %v264
    %v380 = vunpack.c.l.b16 %v265
    %v381 = vunpack.c.h.b16 %v265
    %v382 = vunpack.c.l.b16 %v266
    %v383 = vunpack.c.l.b16 %v267
    %v384 = vunpack.c.h.b16 %v267
    %v385 = vunpack.c.l.b16 %v268
    %v386 = vunpack.c.l.b16 %v269
    %v387 = vunpack.c.h.b16 %v269
    %v388 = vunpack.c.l.b16 %v270
    %v389 = vunpack.c.l.b16 %v271
    %v390 = vunpack.c.h.b16 %v271
    %v391 = vunpack.c.l.b16 %v272
    %v392 = vunpack.c.l.b16 %v273
    %v393 = vunpack.c.h.b16 %v273
    %v394 = vunpack.c.l.b16 %v274
    %v395 = vunpack.c.l.b16 %v275
    %v396 = vunpack.c.h.b16 %v275
    %v397 = vunpack.c.l.b16 %v276
    %v398 = vunpack.c.l.b16 %v277
    %v399 = vunpack.c.h.b16 %v277
    %v400 = vunpack.c.l.b16 %v278
    %v401 = vunpack.c.l.b16 %v279
    %v402 = vunpack.c.h.b16 %v279
    %v403 = vunpack.c.l.b16 %v280
    %v404 = vunpack.c.l.b16 %v281
    %v405 = vunpack.c.h.b16 %v281
    %v406 = vunpack.c.l.b16 %v282
    %v407 = vunpack.c.l.b16 %v283
    %v408 = vunpack.c.h.b16 %v283
    %v409 = vunpack.c.l.b16 %v284
    %v410 = vunpack.c.l.b16 %v285
    %v411 = vunpack.c.h.b16 %v285
    %v412 = vunpack.c.l.b16 %v286
    %v413 = vunpack.c.l.b16 %v287
    %v414 = vunpack.c.h.b16 %v287
    %v415 = vunpack.c.l.b16 %v288
    %v416 = vunpack.c.l.b16 %v289
    %v417 = vunpack.c.h.b16 %v289
    %v418 = vunpack.c.l.b16 %v290
    %v419 = vunpack.c.l.b16 %v291
    %v420 = vunpack.c.h.b16 %v291
    %v421 = vunpack.c.l.b16 %v292
    %v422 = vunpack.c.l.b16 %v293
    %v423 = vunpack.c.h.b16 %v293
    %v424 = vunpack.c.l.b16 %v294
    %v425 = vunpack.c.l.b16 %v295
    %v426 = vunpack.c.h.b16 %v295
    %v427 = vunpack.c.l.b16 %v296
    %v428 = vunpack.c.l.b16 %v297
    %v429 = vunpack.c.h.b16 %v297
    %v430 = vunpack.c.l.b16 %v298
    %v431 = vunpack.c.l.b16 %v299
    %v432 = vunpack.c.h.b16 %v299
    %v433 = vunpack.c.l.b16 %v300
    %v434 = vunpack.c.l.b16 %v301
    %v435 = vunpack.c.h.b16 %v301
    %v436 = vunpack.c.l.b16 %v302
    %v437 = vunpack.c.l.b16 %v303
    %v438 = vunpack.c.h.b16 %v303
    %v439 = vunpack.c.l.b16 %v304
    %v440 = vunpack.c.l.b16 %v305
    %v441 = vunpack.c.h.b16 %v305
    %v442 = vunpack.c.l.b16 %v306
    %v443 = vunpack.c.l.b16 %v307
    %v444 = vunpack.c.h.b16 %v307
    %v445 = vunpack.c.l.b16 %v308
    %v446 = vpack.c.b16 %v377, %v374
    %v447 = vpack.c.b16 %v378, %v375
    %v448 = vpack.c.b16 %v379, %v376
    %v449 = vpack.c.b16 %v383, %v380
    %v450 = vpack.c.b16 %v384, %v381
    %v451 = vpack.c.b16 %v385, %v382
    %v452 = vpack.c.b16 %v389, %v386
    %v453 = vpack.c.b16 %v390, %v387
    %v454 = vpack.c.b16 %v391, %v388
    %v455 = vpack.c.b16 %v395, %v392
    %v456 = vpack.c.b16 %v396, %v393
    %v457 = vpack.c.b16 %v397, %v394
    %v458 = vpack.c.b16 %v401, %v398
    %v459 = vpack.c.b16 %v402, %v399
    %v460 = vpack.c.b16 %v403, %v400
    %v461 = vpack.c.b16 %v407, %v404
    %v462 = vpack.c.b16 %v408, %v405
    %v463 = vpack.c.b16 %v409, %v406
    %v464 = vpack.c.b16 %v413, %v410
    %v465 = vpack.c.b16 %v414, %v411
    %v466 = vpack.c.b16 %v415, %v412
    %v467 = vpack.c.b16 %v419, %v416
    %v468 = vpack.c.b16 %v420, %v417
    %v469 = vpack.c.b16 %v421, %v418
    %v470 = vpack.c.b16 %v425, %v422
    %v471 = vpack.c.b16 %v426, %v423
    %v472 = vpack.c.b16 %v427, %v424
    %v473 = vpack.c.b16 %v431, %v428
    %v474 = vpack.c.b16 %v432, %v429
    %v475 = vpack.c.b16 %v433, %v430
    %v476 = vpack.c.b16 %v437, %v434
    %v477 = vpack.c.b16 %v438, %v435
    %v478 = vpack.c.b16 %v439, %v436
    %v479 = vpack.c.b16 %v443, %v440
    %v480 = vpack.c.b16 %v444, %v441
    %v481 = vpack.c.b16 %v445, %v442
    %vm518 = vcmask 523264
    %v520 = vsel %vm518, %v260, 0
    %522 = vmatprep.subr.bf16.mxu0 %v447
    %523 = vmatpush1.bf16.msra.mxu0 %v446
    %524 = vmatprep.subr.bf16.mxu0 %v450
    %525 = vmatpush1.bf16.msra.mxu0 %v449
    %526 = vmatprep.subr.bf16.mxu0 %v453
    %527 = vmatpush1.bf16.msra.mxu0 %v452
    %528 = vmatprep.subr.bf16.mxu0 %v456
    %529 = vmatpush1.bf16.msra.mxu0 %v455
    %530 = vmatprep.subr.bf16.mxu0 %v459
    %531 = vmatpush1.bf16.msra.mxu0 %v458
    %532 = vmatprep.subr.bf16.mxu0 %v462
    %533 = vmatpush1.bf16.msra.mxu0 %v461
    %534 = vmatprep.subr.bf16.mxu0 %v465
    %535 = vmatpush1.bf16.msra.mxu0 %v464
    %536 = vmatprep.subr.bf16.mxu0 %v468
    %537 = vmatpush1.bf16.msra.mxu0 %v467
    %538 = vmatprep.subr.bf16.mxu0 %v471
    %539 = vmatpush1.bf16.msra.mxu0 %v470
    %540 = vmatprep.subr.bf16.mxu0 %v474
    %541 = vmatpush1.bf16.msra.mxu0 %v473
    %542 = vmatprep.subr.bf16.mxu0 %v477
    %543 = vmatpush1.bf16.msra.mxu0 %v476
    %544 = vmatprep.subr.bf16.mxu0 %v480
    %545 = vmatpush1.bf16.msra.mxu0 %v479
    %546 = vmatprep.subr.bf16.mxu0 0
    %547 = vmatpush1.bf16.msra.mxu0 0
    %548 = vmatprep.subr.bf16.mxu0 0
    %549 = vmatpush1.bf16.msra.mxu0 0
    %550 = vmatprep.subr.bf16.mxu0 0
    %551 = vmatpush1.bf16.msra.mxu0 0
    %552 = vmatprep.subr.bf16.mxu0 0
    %553 = vmatpush1.bf16.msra.mxu0 0
    %554 = vmatprep.mubr.bf16.mxu0 %v520
    %555 = vmatmul.mubr.bf16.gmra.mrb[0].mxu0 %v259
    %v556 = vpop.f32.mrb[0].mxu0
    %v557 = vadd.f32 %v314, %v556
    %v558 = vpop.f32.mrb[0].mxu0
    %v559 = vadd.f32 %v318, %v558
    %v560 = vpop.f32.mrb[0].mxu0
    %v561 = vpop.f32.mrb[0].mxu0
    %562 = vdwg.mxu0
    %563 = vmatprep.subr.bf16.mxu0 0
    %564 = vmatpush1.bf16.msra.mxu0 %v448
    %565 = vmatprep.subr.bf16.mxu0 0
    %566 = vmatpush1.bf16.msra.mxu0 %v451
    %567 = vmatprep.subr.bf16.mxu0 0
    %568 = vmatpush1.bf16.msra.mxu0 %v454
    %569 = vmatprep.subr.bf16.mxu0 0
    %570 = vmatpush1.bf16.msra.mxu0 %v457
    %571 = vmatprep.subr.bf16.mxu0 0
    %572 = vmatpush1.bf16.msra.mxu0 %v460
    %573 = vmatprep.subr.bf16.mxu0 0
    %574 = vmatpush1.bf16.msra.mxu0 %v463
    %575 = vmatprep.subr.bf16.mxu0 0
    %576 = vmatpush1.bf16.msra.mxu0 %v466
    %577 = vmatprep.subr.bf16.mxu0 0
    %578 = vmatpush1.bf16.msra.mxu0 %v469
    %579 = vmatprep.subr.bf16.mxu0 0
    %580 = vmatpush1.bf16.msra.mxu0 %v472
    %581 = vmatprep.subr.bf16.mxu0 0
    %582 = vmatpush1.bf16.msra.mxu0 %v475
    %583 = vmatprep.subr.bf16.mxu0 0
    %584 = vmatpush1.bf16.msra.mxu0 %v478
    %585 = vmatprep.subr.bf16.mxu0 0
    %586 = vmatpush1.bf16.msra.mxu0 %v481
    %587 = vmatprep.subr.bf16.mxu0 0
    %588 = vmatpush1.bf16.msra.mxu0 0
    %589 = vmatprep.subr.bf16.mxu0 0
    %590 = vmatpush1.bf16.msra.mxu0 0
    %591 = vmatprep.subr.bf16.mxu0 0
    %592 = vmatpush1.bf16.msra.mxu0 0
    %593 = vmatprep.subr.bf16.mxu0 0
    %594 = vmatpush1.bf16.msra.mxu0 0
    %595 = vmatprep.mubr.bf16.mxu0 %v520
    %596 = vmatmul.mubr.bf16.gmra.mrb[0].mxu0 %v259
    %v597 = vpop.f32.mrb[0].mxu0
    %v598 = vadd.f32 %v322, %v597
    %v599 = vpop.f32.mrb[0].mxu0
    %v600 = vpop.f32.mrb[0].mxu0
    %v601 = vpop.f32.mrb[0].mxu0
    %602 = vdwg.mxu0
    %v603 = vmax.f32 %v557, 0.0
    %v604 = vmax.f32 %v559, 0.0
    %v605 = vmax.f32 %v598, 0.0
    %v606 = vpack.c.bf16 %v603, %v603
    %v607 = vpack.c.bf16 %v604, %v604
    %v608 = vpack.c.bf16 %v605, %v605
    %v609 = vld [vmem:[%s7] sm:$0xf]
    %v610 = vld [vmem:[%s7 + $0x4] sm:$0xf]
    %v611 = vld [vmem:[%s7 + $0x8] sm:$0xf]
    %v612 = vld [vmem:[%s7 + $0xc] sm:$0xf]
    %v613 = vld [vmem:[%s7 + $0x10] sm:$0xf]
    %v614 = vld [vmem:[%s7 + $0x14] sm:$0xf]
    %v615 = vld [vmem:[%s7 + $0x18] sm:$0xf]
    %v616 = vld [vmem:[%s7 + $0x1c] sm:$0xf]
    %v617 = vld [vmem:[%s7 + $0x20] sm:$0xf]
    %v618 = vld [vmem:[%s7 + $0x24] sm:$0xf]
    %v619 = vld [vmem:[%s7 + $0x28] sm:$0xf]
    %v620 = vld [vmem:[%s7 + $0x2c] sm:$0xf]
    %v621 = vld [vmem:[%s7 + $0x30] sm:$0xf]
    %v622 = vld [vmem:[%s7 + $0x34] sm:$0xf]
    %v623 = vld [vmem:[%s7 + $0x38] sm:$0xf]
    %v624 = vld [vmem:[%s7 + $0x3c] sm:$0xf]
    %v625 = vld [vmem:[%s7 + $0x40] sm:$0xf]
    %v626 = vld [vmem:[%s7 + $0x44] sm:$0xf]
    %v627 = vld [vmem:[%s7 + $0x48] sm:$0xf]
    %v628 = vld [vmem:[%s7 + $0x4c] sm:$0xf]
    %v629 = vld [vmem:[%s7 + $0x50] sm:$0xf]
    %v630 = vld [vmem:[%s7 + $0x54] sm:$0xf]
    %v631 = vld [vmem:[%s7 + $0x58] sm:$0xf]
    %v632 = vld [vmem:[%s7 + $0x5c] sm:$0xf]
    %v633 = vld [vmem:[%s7 + $0x60] sm:$0xf]
    %v634 = vld [vmem:[%s7 + $0x64] sm:$0xf]
    %v635 = vld [vmem:[%s7 + $0x68] sm:$0xf]
    %v636 = vld [vmem:[%s7 + $0x6c] sm:$0xf]
    %v637 = vld [vmem:[%s7 + $0x70] sm:$0xf]
    %v638 = vld [vmem:[%s7 + $0x74] sm:$0xf]
    %v639 = vld [vmem:[%s7 + $0x78] sm:$0xf]
    %v640 = vld [vmem:[%s7 + $0x7c] sm:$0xf]
    %v641 = vld [vmem:[%s7 + $0x80] sm:$0xf]
    %v642 = vld [vmem:[%s7 + $0x84] sm:$0xf]
    %v643 = vld [vmem:[%s7 + $0x88] sm:$0xf]
    %v644 = vld [vmem:[%s7 + $0x8c] sm:$0xf]
    %v645 = vld [vmem:[%s7 + $0x90] sm:$0xf]
    %v646 = vld [vmem:[%s7 + $0x94] sm:$0xf]
    %v647 = vld [vmem:[%s7 + $0x98] sm:$0xf]
    %v648 = vld [vmem:[%s7 + $0x9c] sm:$0xf]
    %v649 = vld [vmem:[%s7 + $0xa0] sm:$0xf]
    %v650 = vld [vmem:[%s7 + $0xa4] sm:$0xf]
    %v651 = vld [vmem:[%s7 + $0xa8] sm:$0xf]
    %v652 = vld [vmem:[%s7 + $0xac] sm:$0xf]
    %v653 = vld [vmem:[%s7 + $0xb0] sm:$0xf]
    %v654 = vld [vmem:[%s7 + $0xb4] sm:$0xf]
    %v655 = vld [vmem:[%s7 + $0xb8] sm:$0xf]
    %v656 = vld [vmem:[%s7 + $0xbc] sm:$0xf]
    %v657 = vld [vmem:[#allocation2] sm:$0x1]
    %v659 = vlaneseq
    %v660 = vshrl.u32 %v659, 7
    %v661 = vsub.s32 0, %v660
    %v662 = vrot.slane %v657, %v661
    %v712 = vunpack.c.l.b16 %v609
    %v713 = vunpack.c.l.b16 %v610
    %v714 = vunpack.c.l.b16 %v611
    %v715 = vunpack.c.l.b16 %v612
    %v716 = vunpack.c.l.b16 %v613
    %v717 = vunpack.c.l.b16 %v614
    %v718 = vunpack.c.l.b16 %v615
    %v719 = vunpack.c.l.b16 %v616
    %v720 = vunpack.c.l.b16 %v617
    %v721 = vunpack.c.l.b16 %v618
    %v722 = vunpack.c.l.b16 %v619
    %v723 = vunpack.c.l.b16 %v620
    %v724 = vunpack.c.l.b16 %v621
    %v725 = vunpack.c.l.b16 %v622
    %v726 = vunpack.c.l.b16 %v623
    %v727 = vunpack.c.l.b16 %v624
    %v728 = vunpack.c.l.b16 %v625
    %v729 = vunpack.c.l.b16 %v626
    %v730 = vunpack.c.l.b16 %v627
    %v731 = vunpack.c.l.b16 %v628
    %v732 = vunpack.c.l.b16 %v629
    %v733 = vunpack.c.l.b16 %v630
    %v734 = vunpack.c.l.b16 %v631
    %v735 = vunpack.c.l.b16 %v632
    %v736 = vunpack.c.l.b16 %v633
    %v737 = vunpack.c.l.b16 %v634
    %v738 = vunpack.c.l.b16 %v635
    %v739 = vunpack.c.l.b16 %v636
    %v740 = vunpack.c.l.b16 %v637
    %v741 = vunpack.c.l.b16 %v638
    %v742 = vunpack.c.l.b16 %v639
    %v743 = vunpack.c.l.b16 %v640
    %v744 = vunpack.c.l.b16 %v641
    %v745 = vunpack.c.l.b16 %v642
    %v746 = vunpack.c.l.b16 %v643
    %v747 = vunpack.c.l.b16 %v644
    %v748 = vunpack.c.l.b16 %v645
    %v749 = vunpack.c.l.b16 %v646
    %v750 = vunpack.c.l.b16 %v647
    %v751 = vunpack.c.l.b16 %v648
    %v752 = vunpack.c.l.b16 %v649
    %v753 = vunpack.c.l.b16 %v650
    %v754 = vunpack.c.l.b16 %v651
    %v755 = vunpack.c.l.b16 %v652
    %v756 = vunpack.c.l.b16 %v653
    %v757 = vunpack.c.l.b16 %v654
    %v758 = vunpack.c.l.b16 %v655
    %v759 = vunpack.c.l.b16 %v656
    %v760 = vpack.c.b16 %v713, %v712
    %v761 = vpack.c.b16 %v715, %v714
    %v762 = vpack.c.b16 %v717, %v716
    %v763 = vpack.c.b16 %v719, %v718
    %v764 = vpack.c.b16 %v721, %v720
    %v765 = vpack.c.b16 %v723, %v722
    %v766 = vpack.c.b16 %v725, %v724
    %v767 = vpack.c.b16 %v727, %v726
    %v768 = vpack.c.b16 %v729, %v728
    %v769 = vpack.c.b16 %v731, %v730
    %v770 = vpack.c.b16 %v733, %v732
    %v771 = vpack.c.b16 %v735, %v734
    %v772 = vpack.c.b16 %v737, %v736
    %v773 = vpack.c.b16 %v739, %v738
    %v774 = vpack.c.b16 %v741, %v740
    %v775 = vpack.c.b16 %v743, %v742
    %v776 = vpack.c.b16 %v745, %v744
    %v777 = vpack.c.b16 %v747, %v746
    %v778 = vpack.c.b16 %v749, %v748
    %v779 = vpack.c.b16 %v751, %v750
    %v780 = vpack.c.b16 %v753, %v752
    %v781 = vpack.c.b16 %v755, %v754
    %v782 = vpack.c.b16 %v757, %v756
    %v783 = vpack.c.b16 %v759, %v758
    %808 = vmatprep.subr.bf16.mxu0 0
    %809 = vmatpush1.bf16.msra.mxu0 %v760
    %810 = vmatprep.subr.bf16.mxu0 0
    %811 = vmatpush1.bf16.msra.mxu0 %v761
    %812 = vmatprep.subr.bf16.mxu0 0
    %813 = vmatpush1.bf16.msra.mxu0 %v762
    %814 = vmatprep.subr.bf16.mxu0 0
    %815 = vmatpush1.bf16.msra.mxu0 %v763
    %816 = vmatprep.subr.bf16.mxu0 0
    %817 = vmatpush1.bf16.msra.mxu0 %v764
    %818 = vmatprep.subr.bf16.mxu0 0
    %819 = vmatpush1.bf16.msra.mxu0 %v765
    %820 = vmatprep.subr.bf16.mxu0 0
    %821 = vmatpush1.bf16.msra.mxu0 %v766
    %822 = vmatprep.subr.bf16.mxu0 0
    %823 = vmatpush1.bf16.msra.mxu0 %v767
    %824 = vmatprep.subr.bf16.mxu0 0
    %825 = vmatpush1.bf16.msra.mxu0 %v768
    %826 = vmatprep.subr.bf16.mxu0 0
    %827 = vmatpush1.bf16.msra.mxu0 %v769
    %828 = vmatprep.subr.bf16.mxu0 0
    %829 = vmatpush1.bf16.msra.mxu0 %v770
    %830 = vmatprep.subr.bf16.mxu0 0
    %831 = vmatpush1.bf16.msra.mxu0 %v771
    %832 = vmatprep.subr.bf16.mxu0 0
    %833 = vmatpush1.bf16.msra.mxu0 %v772
    %834 = vmatprep.subr.bf16.mxu0 0
    %835 = vmatpush1.bf16.msra.mxu0 %v773
    %836 = vmatprep.subr.bf16.mxu0 0
    %837 = vmatpush1.bf16.msra.mxu0 %v774
    %838 = vmatprep.subr.bf16.mxu0 0
    %839 = vmatpush1.bf16.msra.mxu0 %v775
    %840 = vmatprep.mubr.bf16.mxu0 %v607
    %841 = vmatmul.mubr.bf16.gmra.mrb[0].mxu0 %v606
    %v842 = vpop.f32.mrb[0].mxu0
    %v843 = vadd.f32 %v662, %v842
    %v844 = vpop.f32.mrb[0].mxu0
    %v845 = vpop.f32.mrb[0].mxu0
    %v846 = vpop.f32.mrb[0].mxu0
    %847 = vdwg.mxu0
    %848 = vmatprep.subr.bf16.mxu0 0
    %849 = vmatpush1.bf16.msra.mxu0 %v776
    %850 = vmatprep.subr.bf16.mxu0 0
    %851 = vmatpush1.bf16.msra.mxu0 %v777
    %852 = vmatprep.subr.bf16.mxu0 0
    %853 = vmatpush1.bf16.msra.mxu0 %v778
    %854 = vmatprep.subr.bf16.mxu0 0
    %855 = vmatpush1.bf16.msra.mxu0 %v779
    %856 = vmatprep.subr.bf16.mxu0 0
    %857 = vmatpush1.bf16.msra.mxu0 %v780
    %858 = vmatprep.subr.bf16.mxu0 0
    %859 = vmatpush1.bf16.msra.mxu0 %v781
    %860 = vmatprep.subr.bf16.mxu0 0
    %861 = vmatpush1.bf16.msra.mxu0 %v782
    %862 = vmatprep.subr.bf16.mxu0 0
    %863 = vmatpush1.bf16.msra.mxu0 %v783
    %864 = vmatprep.subr.bf16.mxu0 0
    %865 = vmatpush1.bf16.msra.mxu0 0
    %866 = vmatprep.subr.bf16.mxu0 0
    %867 = vmatpush1.bf16.msra.mxu0 0
    %868 = vmatprep.subr.bf16.mxu0 0
    %869 = vmatpush1.bf16.msra.mxu0 0
    %870 = vmatprep.subr.bf16.mxu0 0
    %871 = vmatpush1.bf16.msra.mxu0 0
    %872 = vmatprep.subr.bf16.mxu0 0
    %873 = vmatpush1.bf16.msra.mxu0 0
    %874 = vmatprep.subr.bf16.mxu0 0
    %875 = vmatpush1.bf16.msra.mxu0 0
    %876 = vmatprep.subr.bf16.mxu0 0
    %877 = vmatpush1.bf16.msra.mxu0 0
    %878 = vmatprep.subr.bf16.mxu0 0
    %879 = vmatpush1.bf16.msra.mxu0 0
    %880 = vmatprep.mubr.bf16.mxu0 0
    %881 = vmatmul.mubr.bf16.gmra.mrb[0].mxu0 %v608
    %v882 = vpop.f32.mrb[0].mxu0
    %v883 = vadd.f32 %v843, %v882
    %v884 = vpop.f32.mrb[0].mxu0
    %v885 = vpop.f32.mrb[0].mxu0
    %v886 = vpop.f32.mrb[0].mxu0
    %887 = vdwg.mxu0
    %v888 = vxor.u32 %v883, 2147483648
    %v889 = vmul.f32 %v888, 1.442695
    %v890 = vpow.pop %v889
    %v891 = vadd.f32 %v890, 1.0
    %v892 = vrcp.pop %v891
    %v893 = vmul.f32 1.0, %v892
    %vm894 = vcmask 7168
    %895 = vst.msk [vmem:[%s9] sm:$0xff] %vm894, %v893
    // Predicated region
    $region42: #{mlp_forward.1} parent=1 // pred_check
      _
    $region43: #{mlp_forward.1} parent=1 // pred_check_branch
      %897 = sbr.rel (0) target = $region45
    $region44: #{mlp_forward.1} parent=1 // pred_region
      _
    $region45: #{mlp_forward.1} parent=1 // pred_fallthru
      _
    // Predicated region
    $region46: #{mlp_forward.1} parent=1 // pred_check
      _
    $region47: #{mlp_forward.1} parent=1 // pred_check_branch
      %899 = sbr.rel (0) target = $region49
    $region48: #{mlp_forward.1} parent=1 // pred_region
      _
    $region49: #{mlp_forward.1} parent=1 // pred_fallthru
      _
    %900 = vsyncpa [#allocation4], 1

</llo_original>
